<compile_context>
chip_gen: v6e
topology: v6e:2x2x1
jax: 0.10.0
libtpu: 0.0.40
codegen_flags: <defaults>
</compile_context>

<pallas_src>
import jax
import jax.numpy as jnp
from jax.experimental import pallas as pl
from jax.experimental.pallas import tpu as pltpu

NUM_COORDINATES = 3
IN_FEATURES = NUM_COORDINATES * 2      # 6
HIDDEN = 32
OUTPUT_SIZE = 32
NUM_NODES = 40

PACK = 4                               # logical rows packed per 128-lane row (4*32 = 128)
ROW_TILE_P = 512                       # packed rows per grid step (= 2048 logical rows)


def _mlp_kernel(x_ref, w1_ref, b1_ref, w2_ref, b2_ref, o_ref):
    # x_ref: (block_rows, PACK*IN_FEATURES)   -- 4 logical rows packed per row
    # w1_ref: (24, 128) block-diagonal, b1_ref: (1, 128)
    # w2_ref: (128, 128) block-diagonal, b2_ref: (1, 128)
    h = jnp.dot(x_ref[...], w1_ref[...], preferred_element_type=jnp.float32)
    h = jnp.maximum(h + b1_ref[...], 0.0)                       # ReLU
    y = jnp.dot(h, w2_ref[...], preferred_element_type=jnp.float32)
    o_ref[...] = jnp.maximum(y + b2_ref[...], 0.0).astype(o_ref.dtype)  # ReLU, lane-dense store


def _block_diag(w, pack):
    """Place `w` (kin, kout) `pack` times along the diagonal -> (pack*kin, pack*kout)."""
    kin, kout = w.shape
    big = jnp.zeros((pack * kin, pack * kout), w.dtype)
    for p in range(pack):
        big = big.at[p * kin:(p + 1) * kin, p * kout:(p + 1) * kout].set(w)
    return big


@jax.jit
def previous_predictions_mlp(previous_predictions, w1, b1, w2, b2):
    """previous_predictions: (..., IN_FEATURES) -> (prod(leading), OUTPUT_SIZE)."""
    x = previous_predictions.reshape(-1, IN_FEATURES)
    m = x.shape[0]

    # Pad only to a multiple of PACK=4.  For this model m = batch * 40, so this
    # is a no-op in practice (no extra HBM pass over the input).
    pad = (-m) % PACK
    if pad:
        x = jnp.pad(x, ((0, pad), (0, 0)))
    m_pad = m + pad
    m_p = m_pad // PACK

    # Free layout plumbing: 4 logical rows per packed row.
    x_packed = x.reshape(m_p, PACK * IN_FEATURES)

    # Tiny (<= 64 KiB total) packed parameters; built once per call outside the kernel.
    w1_big = _block_diag(w1, PACK)          # (24, 128)
    w2_big = _block_diag(w2, PACK)          # (128, 128)
    b1_big = jnp.tile(b1, (1, PACK))        # (1, 128)
    b2_big = jnp.tile(b2, (1, PACK))        # (1, 128)

    # Single block for small problems; 512-packed-row tiles (2048 logical rows)
    # otherwise, with a (masked) partial last block handled by Pallas.
    block_rows = m_p if m_p <= ROW_TILE_P else ROW_TILE_P
    grid = (pl.cdiv(m_p, block_rows),)

    param_bytes = (w1_big.size + w2_big.size + b1_big.size + b2_big.size) * 4
    cost = pl.CostEstimate(
        flops=2 * m_pad * (IN_FEATURES * HIDDEN + HIDDEN * OUTPUT_SIZE),
        transcendentals=0,
        bytes_accessed=m_pad * (IN_FEATURES + OUTPUT_SIZE) * 4 + param_bytes,
    )

    out_packed = pl.pallas_call(
        _mlp_kernel,
        out_shape=jax.ShapeDtypeStruct((m_p, PACK * OUTPUT_SIZE), jnp.float32),
        grid_spec=pl.GridSpec(
            grid=grid,
            in_specs=[
                pl.BlockSpec((block_rows, PACK * IN_FEATURES), lambda i: (i, 0)),
                # Constant index_map -> weights/biases stay VMEM-resident across steps.
                pl.BlockSpec((PACK * IN_FEATURES, PACK * HIDDEN), lambda i: (0, 0)),
                pl.BlockSpec((1, PACK * HIDDEN), lambda i: (0, 0)),
                pl.BlockSpec((PACK * HIDDEN, PACK * OUTPUT_SIZE), lambda i: (0, 0)),
                pl.BlockSpec((1, PACK * OUTPUT_SIZE), lambda i: (0, 0)),
            ],
            out_specs=pl.BlockSpec((block_rows, PACK * OUTPUT_SIZE), lambda i: (i, 0)),
        ),
        compiler_params=pltpu.CompilerParams(
            dimension_semantics=("parallel",)),
        cost_estimate=cost,
    )(x_packed, w1_big, b1_big, w2_big, b2_big)

    # Free reshape back to the logical (M, 32) layout.
    return out_packed.reshape(m_pad, OUTPUT_SIZE)[:m]


def init_params(key):
    """Deterministic synthetic parameters (PyTorch Linear shapes, pre-transposed)."""
    k1, k2, k3, k4 = jax.random.split(key, 4)
    bound1 = 1.0 / jnp.sqrt(IN_FEATURES)
    bound2 = 1.0 / jnp.sqrt(HIDDEN)
    w1 = jax.random.uniform(k1, (IN_FEATURES, HIDDEN), jnp.float32, -bound1, bound1)
    b1 = jax.random.uniform(k2, (1, HIDDEN), jnp.float32, -bound1, bound1)
    w2 = jax.random.uniform(k3, (HIDDEN, OUTPUT_SIZE), jnp.float32, -bound2, bound2)
    b2 = jax.random.uniform(k4, (1, OUTPUT_SIZE), jnp.float32, -bound2, bound2)
    return w1, b1, w2, b2


def reference_forward(x, w1, b1, w2, b2):
    h = jnp.maximum(x.reshape(-1, IN_FEATURES) @ w1 + b1, 0.0)
    return jnp.maximum(h @ w2 + b2, 0.0)


if __name__ == "__main__":
    key = jax.random.PRNGKey(0)
    k_params, k_x, k_x2 = jax.random.split(key, 3)

    w1, b1, w2, b2 = init_params(k_params)

    # Small example matching the module: batch=2, num_nodes=40, features=6.
    batch = 2
    x = jax.random.normal(k_x, (batch, NUM_NODES, IN_FEATURES), jnp.float32)

    out = jax.block_until_ready(previous_predictions_mlp(x, w1, b1, w2, b2))
    assert out.shape == (batch * NUM_NODES, OUTPUT_SIZE), out.shape
    ref = reference_forward(x, w1, b1, w2, b2)
    assert jnp.allclose(out, ref, atol=1e-5, rtol=1e-5), "mismatch vs reference (small)"

    # Second (still small) case that exercises the multi-tile + partial-block path:
    # 64*40 = 2560 rows -> 640 packed rows -> grid=(2,) with a partial last block.
    batch2 = 64
    x2 = jax.random.normal(k_x2, (batch2, NUM_NODES, IN_FEATURES), jnp.float32)
    out2 = jax.block_until_ready(previous_predictions_mlp(x2, w1, b1, w2, b2))
    assert out2.shape == (batch2 * NUM_NODES, OUTPUT_SIZE), out2.shape
    ref2 = reference_forward(x2, w1, b1, w2, b2)
    assert jnp.allclose(out2, ref2, atol=1e-5, rtol=1e-5), "mismatch vs reference (tiled)"

    print("KERNEL_OK")
</pallas_src>

<mosaic_0001>
module attributes {stable_mosaic.version = 11 : i64} {
  func.func @_mlp_kernel(%arg0: i32, %arg1: memref<20x24xf32, #tpu.memory_space<vmem>>, %arg2: memref<24x128xf32, #tpu.memory_space<vmem>>, %arg3: memref<1x128xf32, #tpu.memory_space<vmem>>, %arg4: memref<128x128xf32, #tpu.memory_space<vmem>>, %arg5: memref<1x128xf32, #tpu.memory_space<vmem>>, %arg6: memref<20x128xf32, #tpu.memory_space<vmem>>) attributes {dimension_semantics = [#tpu.dimension_semantics<parallel>], iteration_bounds = array<i64: 1>, scalar_prefetch = 0 : i64, scratch_operands = 0 : i64, tpu.core_type = #tpu.core_type<tc>, window_params = [{transform_indices = @transform_0, window_bounds = array<i64: 20, 24>}, {pipeline_mode = #tpu.pipeline_mode<synchronous>, transform_indices = @transform_1, window_bounds = array<i64: 24, 128>}, {pipeline_mode = #tpu.pipeline_mode<synchronous>, transform_indices = @transform_2, window_bounds = array<i64: 1, 128>}, {pipeline_mode = #tpu.pipeline_mode<synchronous>, transform_indices = @transform_3, window_bounds = array<i64: 128, 128>}, {pipeline_mode = #tpu.pipeline_mode<synchronous>, transform_indices = @transform_4, window_bounds = array<i64: 1, 128>}, {transform_indices = @transform_5, window_bounds = array<i64: 20, 128>}]} {
    %c0 = arith.constant 0 : index
    %c0_0 = arith.constant 0 : index
    %0 = vector.load %arg1[%c0, %c0_0] : memref<20x24xf32, #tpu.memory_space<vmem>>, vector<20x24xf32>
    %c0_1 = arith.constant 0 : index
    %c0_2 = arith.constant 0 : index
    %1 = vector.load %arg2[%c0_1, %c0_2] : memref<24x128xf32, #tpu.memory_space<vmem>>, vector<24x128xf32>
    %cst = arith.constant dense<0.000000e+00> : vector<20x128xf32>
    %2 = tpu.matmul %0, %1, %cst {dimension_numbers = #tpu.dot_dimension_numbers<[1], [0], [0], [1], [0, 0, 1, 1], [], []>} : vector<20x24xf32>, vector<24x128xf32>, vector<20x128xf32> -> vector<20x128xf32>
    %c0_3 = arith.constant 0 : index
    %c0_4 = arith.constant 0 : index
    %3 = vector.load %arg3[%c0_3, %c0_4] : memref<1x128xf32, #tpu.memory_space<vmem>>, vector<1x128xf32>
    %4 = vector.broadcast %3 : vector<1x128xf32> to vector<20x128xf32>
    %5 = arith.addf %2, %4 : vector<20x128xf32>
    %cst_5 = arith.constant 0.000000e+00 : f32
    %6 = vector.broadcast %cst_5 : f32 to vector<20x128xf32>
    %7 = arith.maximumf %5, %6 : vector<20x128xf32>
    %c0_6 = arith.constant 0 : index
    %c0_7 = arith.constant 0 : index
    %8 = vector.load %arg4[%c0_6, %c0_7] : memref<128x128xf32, #tpu.memory_space<vmem>>, vector<128x128xf32>
    %cst_8 = arith.constant dense<0.000000e+00> : vector<20x128xf32>
    %9 = tpu.matmul %7, %8, %cst_8 {dimension_numbers = #tpu.dot_dimension_numbers<[1], [0], [0], [1], [0, 0, 1, 1], [], []>} : vector<20x128xf32>, vector<128x128xf32>, vector<20x128xf32> -> vector<20x128xf32>
    %c0_9 = arith.constant 0 : index
    %c0_10 = arith.constant 0 : index
    %10 = vector.load %arg5[%c0_9, %c0_10] : memref<1x128xf32, #tpu.memory_space<vmem>>, vector<1x128xf32>
    %11 = vector.broadcast %10 : vector<1x128xf32> to vector<20x128xf32>
    %12 = arith.addf %9, %11 : vector<20x128xf32>
    %cst_11 = arith.constant 0.000000e+00 : f32
    %13 = vector.broadcast %cst_11 : f32 to vector<20x128xf32>
    %14 = arith.maximumf %12, %13 : vector<20x128xf32>
    %c0_12 = arith.constant 0 : index
    %c0_13 = arith.constant 0 : index
    %15 = vector.load %arg6[%c0_12, %c0_13] : memref<20x128xf32, #tpu.memory_space<vmem>>, vector<20x128xf32>
    tpu.vector_store %arg6[%c0_12, %c0_13], %14 {strides = array<i32>} : memref<20x128xf32, #tpu.memory_space<vmem>>, vector<20x128xf32>,
    return
  }
  func.func @transform_0(%arg0: i32) -> (i32, i32) {
    %c0_i32 = arith.constant 0 : i32
    %c0_i32_0 = arith.constant 0 : i32
    return %arg0, %c0_i32 : i32, i32
  }
  func.func @transform_1(%arg0: i32) -> (i32, i32) {
    %c0_i32 = arith.constant 0 : i32
    %c0_i32_0 = arith.constant 0 : i32
    %c0_i32_1 = arith.constant 0 : i32
    return %c0_i32, %c0_i32_0 : i32, i32
  }
  func.func @transform_2(%arg0: i32) -> (i32, i32) {
    %c0_i32 = arith.constant 0 : i32
    %c0_i32_0 = arith.constant 0 : i32
    %c0_i32_1 = arith.constant 0 : i32
    return %c0_i32, %c0_i32_0 : i32, i32
  }
  func.func @transform_3(%arg0: i32) -> (i32, i32) {
    %c0_i32 = arith.constant 0 : i32
    %c0_i32_0 = arith.constant 0 : i32
    %c0_i32_1 = arith.constant 0 : i32
    return %c0_i32, %c0_i32_0 : i32, i32
  }
  func.func @transform_4(%arg0: i32) -> (i32, i32) {
    %c0_i32 = arith.constant 0 : i32
    %c0_i32_0 = arith.constant 0 : i32
    %c0_i32_1 = arith.constant 0 : i32
    return %c0_i32, %c0_i32_0 : i32, i32
  }
  func.func @transform_5(%arg0: i32) -> (i32, i32) {
    %c0_i32 = arith.constant 0 : i32
    %c0_i32_0 = arith.constant 0 : i32
    return %arg0, %c0_i32 : i32, i32
  }
}

</mosaic_0001>

<llo_original>
// kernel: previous_predictions_mlp.1
$region0: #{previous_predictions_mlp.1}
  #allocation0 [shape = 'u32[]', space=smem, size = 0x4, offset = 0x4, fixed_abs, tag = 'smem constant byte address 0x4 - core index']
  #allocation1 [shape = 'u32[144,128]{1,0:T(1,128)}', space=vmem, size = 0x12000, scoped, tag = 'internal scratch']
  %s0 = inlined_call_operand.vmem [shape: f32[20,24], index: 0, kind: input, shape index: {}]
  %s1 = inlined_call_operand.vmem [shape: f32[24,128], index: 1, kind: input, shape index: {}]
  %s2 = inlined_call_operand.vmem [shape: f32[1,128], index: 2, kind: input, shape index: {}]
  %s3 = inlined_call_operand.vmem [shape: f32[128,128], index: 3, kind: input, shape index: {}]
  %s4 = inlined_call_operand.vmem [shape: f32[1,128], index: 4, kind: input, shape index: {}]
  %s5 = inlined_call_operand.vmem [shape: f32[20,128], index: 5, kind: output, shape index: {}]
  %s6 = sld [smem:[#allocation0]]
  $region30: #{previous_predictions_mlp.1} parent=0
    _
  %s8 = ssub.s32 1, %s6
  %s9 = scalar_select 0, %s8, %s6
  // Predicated region
  $region2: #{previous_predictions_mlp.1} parent=0 // pred_check
    _
  $region3: #{previous_predictions_mlp.1} parent=0 // pred_check_branch
    %11 = sbr.rel (0) target = $region5
  $region4: #{previous_predictions_mlp.1} parent=0 // pred_region
    _
  $region5: #{previous_predictions_mlp.1} parent=0 // pred_fallthru
    _
  // Predicated region
  $region6: #{previous_predictions_mlp.1} parent=0 // pred_check
    _
  $region7: #{previous_predictions_mlp.1} parent=0 // pred_check_branch
    %13 = sbr.rel (0) target = $region9
  $region8: #{previous_predictions_mlp.1} parent=0 // pred_region
    _
  $region9: #{previous_predictions_mlp.1} parent=0 // pred_fallthru
    _
  // Predicated region
  $region10: #{previous_predictions_mlp.1} parent=0 // pred_check
    _
  $region11: #{previous_predictions_mlp.1} parent=0 // pred_check_branch
    %15 = sbr.rel (0) target = $region13
  $region12: #{previous_predictions_mlp.1} parent=0 // pred_region
    _
  $region13: #{previous_predictions_mlp.1} parent=0 // pred_fallthru
    _
  // Predicated region
  $region14: #{previous_predictions_mlp.1} parent=0 // pred_check
    _
  $region15: #{previous_predictions_mlp.1} parent=0 // pred_check_branch
    %17 = sbr.rel (0) target = $region17
  $region16: #{previous_predictions_mlp.1} parent=0 // pred_region
    _
  $region17: #{previous_predictions_mlp.1} parent=0 // pred_fallthru
    _
  // Predicated region
  $region18: #{previous_predictions_mlp.1} parent=0 // pred_check
    _
  $region19: #{previous_predictions_mlp.1} parent=0 // pred_check_branch
    %19 = sbr.rel (0) target = $region21
  $region20: #{previous_predictions_mlp.1} parent=0 // pred_region
    _
  $region21: #{previous_predictions_mlp.1} parent=0 // pred_fallthru
    _
  %v20 = vld [vmem:[%s0] sm:$0xff]
  %v21 = vld [vmem:[%s0 + $0x8] sm:$0xff]
  %v22 = vld [vmem:[%s0 + $0x10] sm:$0xf]
  %v23 = vld [vmem:[%s1] sm:$0xff]
  %v24 = vld [vmem:[%s1 + $0x8] sm:$0xff]
  %v25 = vld [vmem:[%s1 + $0x10] sm:$0xff]
  %v26 = vld [vmem:[%s2] sm:$0x1]
  %v28 = vlaneseq
  %v29 = vshrl.u32 %v28, 7
  %v30 = vsub.s32 0, %v29
  %v31 = vrot.slane %v26, %v30
  %vm33 = vcmask 195584
  %v35 = vsel %vm33, %v20, 0
  %v38 = vsel %vm33, %v21, 0
  %v41 = vsel %vm33, %v22, 0
  %43 = vmatprep.subr.mxu0 0.0
  %44 = vmatpush1.msra.mxu0 0.0
  %45 = vmatprep.subr.mxu0 0.0
  %46 = vmatpush1.msra.mxu0 0.0
  %47 = vmatprep.subr.mxu0 0.0
  %48 = vmatpush1.msra.mxu0 0.0
  %49 = vmatprep.subr.mxu0 0.0
  %50 = vmatpush1.msra.mxu0 0.0
  %51 = vmatprep.subr.mxu0 0.0
  %52 = vmatpush1.msra.mxu0 0.0
  %53 = vmatprep.subr.mxu0 0.0
  %54 = vmatpush1.msra.mxu0 0.0
  %55 = vmatprep.subr.mxu0 0.0
  %56 = vmatpush1.msra.mxu0 0.0
  %57 = vmatprep.subr.mxu0 0.0
  %58 = vmatpush1.msra.mxu0 0.0
  %59 = vmatprep.subr.mxu0 0.0
  %60 = vmatpush1.msra.mxu0 0.0
  %61 = vmatprep.subr.mxu0 0.0
  %62 = vmatpush1.msra.mxu0 0.0
  %63 = vmatprep.subr.mxu0 0.0
  %64 = vmatpush1.msra.mxu0 0.0
  %65 = vmatprep.subr.mxu0 0.0
  %66 = vmatpush1.msra.mxu0 0.0
  %67 = vmatprep.subr.mxu0 0.0
  %68 = vmatpush1.msra.mxu0 0.0
  %69 = vmatprep.subr.mxu0 0.0
  %70 = vmatpush1.msra.mxu0 %v25
  %71 = vmatprep.subr.mxu0 0.0
  %72 = vmatpush1.msra.mxu0 %v24
  %73 = vmatprep.subr.mxu0 0.0
  %74 = vmatpush1.msra.mxu0 %v23
  %75 = vmatprep.subr.mxu0 0.0
  %76 = vmatpush2.msra.mxu0 0.0
  %77 = vmatprep.subr.mxu0 0.0
  %78 = vmatpush2.msra.mxu0 0.0
  %79 = vmatprep.subr.mxu0 0.0
  %80 = vmatpush2.msra.mxu0 0.0
  %81 = vmatprep.subr.mxu0 0.0
  %82 = vmatpush2.msra.mxu0 0.0
  %83 = vmatprep.subr.mxu0 0.0
  %84 = vmatpush2.msra.mxu0 0.0
  %85 = vmatprep.subr.mxu0 0.0
  %86 = vmatpush2.msra.mxu0 0.0
  %87 = vmatprep.subr.mxu0 0.0
  %88 = vmatpush2.msra.mxu0 0.0
  %89 = vmatprep.subr.mxu0 0.0
  %90 = vmatpush2.msra.mxu0 0.0
  %91 = vmatprep.subr.mxu0 0.0
  %92 = vmatpush2.msra.mxu0 0.0
  %93 = vmatprep.subr.mxu0 0.0
  %94 = vmatpush2.msra.mxu0 0.0
  %95 = vmatprep.subr.mxu0 0.0
  %96 = vmatpush2.msra.mxu0 0.0
  %97 = vmatprep.subr.mxu0 0.0
  %98 = vmatpush2.msra.mxu0 0.0
  %99 = vmatprep.subr.mxu0 0.0
  %100 = vmatpush2.msra.mxu0 0.0
  %101 = vmatprep.subr.mxu0 0.0
  %102 = vmatpush2.msra.mxu0 0.0
  %103 = vmatprep.subr.mxu0 0.0
  %104 = vmatpush2.msra.mxu0 0.0
  %105 = vmatprep.subr.mxu0 0.0
  %106 = vmatpush2.msra.mxu0 0.0
  %107 = vmatprep.mubr.f32.mxu0 0.0
  %108 = vmatmul.mubr.f32.gmra.mxu0 %v35
  %v109 = vpop.f32.mrf.mxu0
  %v110 = vadd.f32 %v31, %v109
  %v111 = vpop.f32.mrf.mxu0
  %112 = vmatprep.mubr.f32.mxu0 0.0
  %113 = vmatmul.mubr.f32.gmra.mxu0 %v38
  %v114 = vpop.f32.mrf.mxu0
  %v115 = vadd.f32 %v31, %v114
  %v116 = vpop.f32.mrf.mxu0
  %117 = vmatprep.mubr.f32.mxu0 0.0
  %118 = vmatmul.mubr.f32.gmra.mxu0 %v41
  %v119 = vpop.f32.mrf.mxu0
  %v120 = vadd.f32 %v31, %v119
  %v121 = vpop.f32.mrf.mxu0
  %122 = vdwg.mxu0
  %v123 = vmax.f32 %v110, 0.0
  %v124 = vmax.f32 %v115, 0.0
  %v125 = vmax.f32 %v120, 0.0
  %v126 = vld [vmem:[%s3] sm:$0xff]
  %v127 = vld [vmem:[%s3 + $0x8] sm:$0xff]
  %v128 = vld [vmem:[%s3 + $0x10] sm:$0xff]
  %v129 = vld [vmem:[%s3 + $0x18] sm:$0xff]
  %v130 = vld [vmem:[%s3 + $0x20] sm:$0xff]
  %v131 = vld [vmem:[%s3 + $0x28] sm:$0xff]
  %v132 = vld [vmem:[%s3 + $0x30] sm:$0xff]
  %v133 = vld [vmem:[%s3 + $0x38] sm:$0xff]
  %v134 = vld [vmem:[%s3 + $0x40] sm:$0xff]
  %v135 = vld [vmem:[%s3 + $0x48] sm:$0xff]
  %v136 = vld [vmem:[%s3 + $0x50] sm:$0xff]
  %v137 = vld [vmem:[%s3 + $0x58] sm:$0xff]
  %v138 = vld [vmem:[%s3 + $0x60] sm:$0xff]
  %v139 = vld [vmem:[%s3 + $0x68] sm:$0xff]
  %v140 = vld [vmem:[%s3 + $0x70] sm:$0xff]
  %v141 = vld [vmem:[%s3 + $0x78] sm:$0xff]
  %v142 = vld [vmem:[%s4] sm:$0x1]
  %v144 = vlaneseq
  %v145 = vshrl.u32 %v144, 7
  %v146 = vsub.s32 0, %v145
  %v147 = vrot.slane %v142, %v146
  %149 = vmatprep.subr.mxu0 0.0
  %150 = vmatpush1.msra.mxu0 %v141
  %151 = vmatprep.subr.mxu0 0.0
  %152 = vmatpush1.msra.mxu0 %v140
  %153 = vmatprep.subr.mxu0 0.0
  %154 = vmatpush1.msra.mxu0 %v139
  %155 = vmatprep.subr.mxu0 0.0
  %156 = vmatpush1.msra.mxu0 %v138
  %157 = vmatprep.subr.mxu0 0.0
  %158 = vmatpush1.msra.mxu0 %v137
  %159 = vmatprep.subr.mxu0 0.0
  %160 = vmatpush1.msra.mxu0 %v136
  %161 = vmatprep.subr.mxu0 0.0
  %162 = vmatpush1.msra.mxu0 %v135
  %163 = vmatprep.subr.mxu0 0.0
  %164 = vmatpush1.msra.mxu0 %v134
  %165 = vmatprep.subr.mxu0 0.0
  %166 = vmatpush1.msra.mxu0 %v133
  %167 = vmatprep.subr.mxu0 0.0
  %168 = vmatpush1.msra.mxu0 %v132
  %169 = vmatprep.subr.mxu0 0.0
  %170 = vmatpush1.msra.mxu0 %v131
  %171 = vmatprep.subr.mxu0 0.0
  %172 = vmatpush1.msra.mxu0 %v130
  %173 = vmatprep.subr.mxu0 0.0
  %174 = vmatpush1.msra.mxu0 %v129
  %175 = vmatprep.subr.mxu0 0.0
  %176 = vmatpush1.msra.mxu0 %v128
  %177 = vmatprep.subr.mxu0 0.0
  %178 = vmatpush1.msra.mxu0 %v127
  %179 = vmatprep.subr.mxu0 0.0
  %180 = vmatpush1.msra.mxu0 %v126
  %181 = vmatprep.subr.mxu0 0.0
  %182 = vmatpush2.msra.mxu0 0.0
  %183 = vmatprep.subr.mxu0 0.0
  %184 = vmatpush2.msra.mxu0 0.0
  %185 = vmatprep.subr.mxu0 0.0
  %186 = vmatpush2.msra.mxu0 0.0
  %187 = vmatprep.subr.mxu0 0.0
  %188 = vmatpush2.msra.mxu0 0.0
  %189 = vmatprep.subr.mxu0 0.0
  %190 = vmatpush2.msra.mxu0 0.0
  %191 = vmatprep.subr.mxu0 0.0
  %192 = vmatpush2.msra.mxu0 0.0
  %193 = vmatprep.subr.mxu0 0.0
  %194 = vmatpush2.msra.mxu0 0.0
  %195 = vmatprep.subr.mxu0 0.0
  %196 = vmatpush2.msra.mxu0 0.0
  %197 = vmatprep.subr.mxu0 0.0
  %198 = vmatpush2.msra.mxu0 0.0
  %199 = vmatprep.subr.mxu0 0.0
  %200 = vmatpush2.msra.mxu0 0.0
  %201 = vmatprep.subr.mxu0 0.0
  %202 = vmatpush2.msra.mxu0 0.0
  %203 = vmatprep.subr.mxu0 0.0
  %204 = vmatpush2.msra.mxu0 0.0
  %205 = vmatprep.subr.mxu0 0.0
  %206 = vmatpush2.msra.mxu0 0.0
  %207 = vmatprep.subr.mxu0 0.0
  %208 = vmatpush2.msra.mxu0 0.0
  %209 = vmatprep.subr.mxu0 0.0
  %210 = vmatpush2.msra.mxu0 0.0
  %211 = vmatprep.subr.mxu0 0.0
  %212 = vmatpush2.msra.mxu0 0.0
  %213 = vmatprep.mubr.f32.mxu0 0.0
  %214 = vmatmul.mubr.f32.gmra.mxu0 %v123
  %v215 = vpop.f32.mrf.mxu0
  %v216 = vadd.f32 %v147, %v215
  %v217 = vpop.f32.mrf.mxu0
  %218 = vmatprep.mubr.f32.mxu0 0.0
  %219 = vmatmul.mubr.f32.gmra.mxu0 %v124
  %v220 = vpop.f32.mrf.mxu0
  %v221 = vadd.f32 %v147, %v220
  %v222 = vpop.f32.mrf.mxu0
  %223 = vmatprep.mubr.f32.mxu0 0.0
  %224 = vmatmul.mubr.f32.gmra.mxu0 %v125
  %v225 = vpop.f32.mrf.mxu0
  %v226 = vadd.f32 %v147, %v225
  %v227 = vpop.f32.mrf.mxu0
  %228 = vdwg.mxu0
  %v229 = vmax.f32 %v216, 0.0
  %v230 = vmax.f32 %v221, 0.0
  %v231 = vmax.f32 %v226, 0.0
  %232 = vst [vmem:[%s5] sm:$0xff] %v229
  %233 = vst [vmem:[%s5 + $0x8] sm:$0xff] %v230
  %234 = vst [vmem:[%s5 + $0x10] sm:$0xf] %v231
  // Predicated region
  $region22: #{previous_predictions_mlp.1} parent=0 // pred_check
    _
  $region23: #{previous_predictions_mlp.1} parent=0 // pred_check_branch
    %236 = sbr.rel (0) target = $region25
  $region24: #{previous_predictions_mlp.1} parent=0 // pred_region
    _
  $region25: #{previous_predictions_mlp.1} parent=0 // pred_fallthru
    _
  // Predicated region
  $region26: #{previous_predictions_mlp.1} parent=0 // pred_check
    _
  $region27: #{previous_predictions_mlp.1} parent=0 // pred_check_branch
    %238 = sbr.rel (0) target = $region29
  $region28: #{previous_predictions_mlp.1} parent=0 // pred_region
    _
  $region29: #{previous_predictions_mlp.1} parent=0 // pred_fallthru
    _

</llo_original>
